<compile_context>
chip_gen: v6e
topology: v6e:2x2x1
jax: 0.10.0
libtpu: 0.0.40
codegen_flags: <defaults>
</compile_context>

<pallas_src>
import jax
import jax.numpy as jnp
from jax import lax
from jax.experimental import pallas as pl
from jax.experimental.pallas import tpu as pltpu


def _round_up(x, m):
    return ((x + m - 1) // m) * m


def least_square_estimation(A, b, *, tm_max=16384, num_cores=2):
    """Pallas implementation of LeastSquareEstimation.forward. Returns (x, error)."""
    M, N = A.shape
    assert b.shape == (M, 1)
    W = N + 1                        # fused [A | b] width
    r = max(1, 128 // W)             # rows folded into the lane dimension
    FW = r * W                       # folded row width (<= 128 when W <= 128)

    # ---- wrapper-side input prep: fuse b, pad rows, lane-fold (free reshape) ----
    Ab = jnp.concatenate([A, b.astype(A.dtype)], axis=1)        # (M, W)

    # Folded-row tile: biggest that fits a ~16 MiB double-buffered input window
    # (VMEM-safe on v5e/v6e at 128 MiB physical and on v7x at 64 MiB), capped by
    # tm_max and by the problem size.
    lane_bytes = _round_up(FW, 128) * jnp.dtype(A.dtype).itemsize
    fit = max(8, (((16 * 1024 * 1024) // (2 * lane_bytes)) // 8) * 8)
    Mf = -(-M // r)                                  # folded rows needed
    tm_max = max(8, (tm_max // 8) * 8)
    tmf = min(tm_max, fit, _round_up(Mf, 8))

    steps = -(-Mf // tmf)                            # total streaming steps
    C = max(1, num_cores)                            # "parallel" axis (v7x: 2 TCs)
    S = -(-steps // C)                               # steps per core
    Mf_pad = C * S * tmf
    Mp = Mf_pad * r
    if Mp != M:
        Ab = jnp.pad(Ab, ((0, Mp - M), (0, 0)))      # zero rows contribute nothing
    F = Ab.reshape(Mf_pad, FW)                       # free row-major lane-fold

    # ---- kernel 1: streaming folded-Gram accumulation ---------------------------
    def gram_kernel(f_ref, g_ref):
        @pl.when(pl.program_id(1) == 0)
        def _init():
            g_ref[...] = jnp.zeros_like(g_ref)

        f = f_ref[...]                               # (tmf, FW), native dtype -> MXU
        # F^T F: dim-0 contraction == transposed-LHS matmul (native on the MXU).
        g_ref[...] += lax.dot_general(f, f, (((0,), (0,)), ((), ())),
                                      preferred_element_type=jnp.float32)

    # TODO(synk): optionally pipeline_mode=pl.Buffered(3) on the input if xprof
    # still shows exposed DMA gaps after enlarging the tile.
    g_partial = pl.pallas_call(
        gram_kernel,
        out_shape=jax.ShapeDtypeStruct((C, FW, FW), jnp.float32),
        grid=(C, S),
        in_specs=[pl.BlockSpec((tmf, FW), lambda c, s: (c * S + s, 0))],
        out_specs=pl.BlockSpec((None, FW, FW), lambda c, s: (c, 0, 0)),
        compiler_params=pltpu.CompilerParams(
            dimension_semantics=("parallel", "arbitrary"),
            vmem_limit_bytes=40 * 1024 * 1024,       # > 2x8 MiB buffers; < 64 MiB v7x
        ),
    )(F)

    # ---- kernel 2: combine partials, extract Gram pieces, solve, error ----------
    def solve_kernel(g_ref, x_ref, err_ref):
        G = g_ref[0]
        for c in range(1, C):
            G = G + g_ref[c]

        # Sum the r diagonal WxW blocks of the folded Gram -> Ab^T Ab, via a masked
        # projection P[a,k] = (a % W == k): AbtAb = P^T (G * blockdiag_mask) P.
        rows = lax.broadcasted_iota(jnp.int32, (FW, FW), 0)
        cols = lax.broadcasted_iota(jnp.int32, (FW, FW), 1)
        Gd = jnp.where(rows // W == cols // W, G, 0.0)
        pa = lax.broadcasted_iota(jnp.int32, (FW, W), 0) % W
        pk = lax.broadcasted_iota(jnp.int32, (FW, W), 1)
        P = jnp.where(pa == pk, 1.0, 0.0).astype(jnp.float32)
        GdP = lax.dot_general(Gd, P, (((1,), (0,)), ((), ())),
                              preferred_element_type=jnp.float32)      # (FW, W)
        AbtAb = lax.dot_general(P, GdP, (((0,), (0,)), ((), ())),
                                preferred_element_type=jnp.float32)    # (W, W)

        AtA = AbtAb[0:N, 0:N]            # (N, N)
        Atb = AbtAb[0:N, N:W]            # (N, 1)
        btb = AbtAb[N:W, N:W]            # (1, 1)

        # Gauss-Jordan inverse, fully unrolled (N static & small); no pivoting --
        # A^T A is SPD for full-column-rank A (same assumption as the reference).
        # TODO(synk): for large N switch to a lax.fori_loop / blocked elimination.
        Mat = AtA
        Inv = jnp.eye(N, dtype=jnp.float32)
        row_ids = lax.broadcasted_iota(jnp.int32, (N, N), 0)
        row_ids_col = lax.broadcasted_iota(jnp.int32, (N, 1), 0)
        for k in range(N):
            pivot = Mat[k:k + 1, k:k + 1]                    # (1,1) static slice
            inv_p = 1.0 / pivot                              # exact pivot reciprocal
            piv_row_M = Mat[k:k + 1, :] * inv_p              # (1, N)
            piv_row_I = Inv[k:k + 1, :] * inv_p              # (1, N)
            factors = jnp.where(row_ids_col == k, 0.0, Mat[:, k:k + 1])  # (N, 1)
            Mat = Mat - factors * piv_row_M
            Inv = Inv - factors * piv_row_I
            Mat = jnp.where(row_ids == k, piv_row_M, Mat)
            Inv = jnp.where(row_ids == k, piv_row_I, Inv)

        # x as a lane-dense row: x_row[0, i] = sum_k Inv[i, k] * Atb[k, 0]
        x_row = lax.dot_general(Atb, Inv, (((0,), (1,)), ((), ())),
                                preferred_element_type=jnp.float32)     # (1, N)

        # error = ||A x - b||^2 = b^Tb - 2 x^T A^Tb + x^T (A^TA) x, clamped at 0.
        xtAtb = jnp.dot(x_row, Atb, preferred_element_type=jnp.float32)  # (1, 1)
        t = jnp.dot(x_row, AtA, preferred_element_type=jnp.float32)      # (1, N)
        quad = jnp.sum(t * x_row).reshape(1, 1)
        err = jnp.maximum(btb - 2.0 * xtAtb + quad, 0.0)

        x_ref[...] = x_row
        err_ref[...] = err

    x_row, err = pl.pallas_call(
        solve_kernel,
        out_shape=(jax.ShapeDtypeStruct((1, N), jnp.float32),
                   jax.ShapeDtypeStruct((1, 1), jnp.float32)),
    )(g_partial)

    return x_row.reshape(N, 1), err[0, 0]


if __name__ == "__main__":
    key = jax.random.PRNGKey(0)
    k_a, k_b = jax.random.split(key)
    M, N = 1024, 8
    A = jax.random.normal(k_a, (M, N), dtype=jnp.float32)
    b = jax.random.normal(k_b, (M, 1), dtype=jnp.float32)

    # Small tile so the streaming Gram accumulation runs over several grid steps
    # on both "cores" (C=2, S=3 with these shapes).
    x, err = least_square_estimation(A, b, tm_max=16)
    jax.block_until_ready((x, err))

    # Pure-JAX reference.
    AtA = A.T @ A
    x_ref = jnp.linalg.inv(AtA) @ (A.T @ b)
    err_ref = jnp.sum((A @ x_ref - b) ** 2)

    assert x.shape == (N, 1)
    assert bool(jnp.all(jnp.isfinite(x))) and bool(jnp.isfinite(err))
    assert bool(jnp.allclose(x, x_ref, rtol=1e-2, atol=1e-3)), (x, x_ref)
    assert bool(jnp.allclose(err, err_ref, rtol=1e-2, atol=1e-3)), (err, err_ref)

    print("KERNEL_OK")
</pallas_src>

<mosaic_0001>
module attributes {stable_mosaic.version = 11 : i64} {
  func.func @gram_kernel(%arg0: i32, %arg1: i32, %arg2: memref<16x126xf32, #tpu.memory_space<vmem>>, %arg3: memref<1x126x126xf32, #tpu.memory_space<vmem>>) attributes {dimension_semantics = [#tpu.dimension_semantics<parallel>, #tpu.dimension_semantics<arbitrary>], iteration_bounds = array<i64: 2, 3>, scalar_prefetch = 0 : i64, scratch_operands = 0 : i64, tpu.core_type = #tpu.core_type<tc>, window_params = [{transform_indices = @transform_0, window_bounds = array<i64: 16, 126>}, {transform_indices = @transform_1, window_bounds = array<i64: 1, 126, 126>}]} {
    %c0_i32 = arith.constant 0 : i32
    %0 = arith.cmpi eq, %arg1, %c0_i32 : i32
    %1 = arith.extui %0 : i1 to i32
    %c0_i32_0 = arith.constant 0 : i32
    %2 = arith.cmpi ne, %1, %c0_i32_0 : i32
    scf.if %2 {
      %cst_8 = arith.constant 0.000000e+00 : f32
      %11 = vector.broadcast %cst_8 : f32 to vector<126x126xf32>
      %c0_9 = arith.constant 0 : index
      %c0_10 = arith.constant 0 : index
      %c0_11 = arith.constant 0 : index
      %12 = vector.load %arg3[%c0_9, %c0_10, %c0_11] : memref<1x126x126xf32, #tpu.memory_space<vmem>>, vector<1x126x126xf32>
      %13 = vector.shape_cast %12 : vector<1x126x126xf32> to vector<126x126xf32>
      %14 = vector.shape_cast %11 : vector<126x126xf32> to vector<1x126x126xf32>
      tpu.vector_store %arg3[%c0_9, %c0_10, %c0_11], %14 {strides = array<i32>} : memref<1x126x126xf32, #tpu.memory_space<vmem>>, vector<1x126x126xf32>,
    } else {
    }
    %c0 = arith.constant 0 : index
    %c0_1 = arith.constant 0 : index
    %3 = vector.load %arg2[%c0, %c0_1] : memref<16x126xf32, #tpu.memory_space<vmem>>, vector<16x126xf32>
    %c0_2 = arith.constant 0 : index
    %c0_3 = arith.constant 0 : index
    %c0_4 = arith.constant 0 : index
    %4 = vector.load %arg3[%c0_2, %c0_3, %c0_4] : memref<1x126x126xf32, #tpu.memory_space<vmem>>, vector<1x126x126xf32>
    %5 = vector.shape_cast %4 : vector<1x126x126xf32> to vector<126x126xf32>
    %cst = arith.constant dense<0.000000e+00> : vector<126x126xf32>
    %6 = tpu.matmul %3, %3, %cst {dimension_numbers = #tpu.dot_dimension_numbers<[0], [0], [1], [1], [0, 1, 1, 1], [], []>} : vector<16x126xf32>, vector<16x126xf32>, vector<126x126xf32> -> vector<126x126xf32>
    %7 = arith.addf %5, %6 : vector<126x126xf32>
    %c0_5 = arith.constant 0 : index
    %c0_6 = arith.constant 0 : index
    %c0_7 = arith.constant 0 : index
    %8 = vector.load %arg3[%c0_5, %c0_6, %c0_7] : memref<1x126x126xf32, #tpu.memory_space<vmem>>, vector<1x126x126xf32>
    %9 = vector.shape_cast %8 : vector<1x126x126xf32> to vector<126x126xf32>
    %10 = vector.shape_cast %7 : vector<126x126xf32> to vector<1x126x126xf32>
    tpu.vector_store %arg3[%c0_5, %c0_6, %c0_7], %10 {strides = array<i32>} : memref<1x126x126xf32, #tpu.memory_space<vmem>>, vector<1x126x126xf32>,
    return
  }
  func.func @transform_0(%arg0: i32, %arg1: i32) -> (i32, i32) {
    %c3_i32 = arith.constant 3 : i32
    %0 = arith.muli %arg0, %c3_i32 : i32
    %1 = arith.addi %0, %arg1 : i32
    %c0_i32 = arith.constant 0 : i32
    %c0_i32_0 = arith.constant 0 : i32
    return %1, %c0_i32 : i32, i32
  }
  func.func @transform_1(%arg0: i32, %arg1: i32) -> (i32, i32, i32) {
    %c0_i32 = arith.constant 0 : i32
    %c0_i32_0 = arith.constant 0 : i32
    %c0_i32_1 = arith.constant 0 : i32
    return %arg0, %c0_i32, %c0_i32_0 : i32, i32, i32
  }
}

</mosaic_0001>

<llo_original>
// kernel: tpu_custom_call.1
$region0: #{tpu_custom_call.1}
  #allocation0 [shape = 'u32[]', space=smem, size = 0x4, offset = 0x4, fixed_abs, tag = 'smem constant byte address 0x4 - core index']
  #allocation1 [shape = 'u32[144,128]{1,0:T(1,128)}', space=vmem, size = 0x12000, scoped, tag = 'internal scratch']
  %s0 = inlined_call_operand.hbm [shape: f32[96,126], index: 0, kind: input, shape index: {}]
  %s1 = inlined_call_operand.vmem [shape: f32[2,126,126], index: 1, kind: output, shape index: {}]
  %s2 = sld [smem:[#allocation0]]
  $region45: #{tpu_custom_call.1} parent=0
    _
  %s4 = ssub.s32 1, %s2
  %s5 = scalar_select 0, %s4, %s2
  $region1: #{tpu_custom_call.1} parent=0
    #allocation2 [shape = 'u8[16384]{0}', space=vmem, size = 0x4000, scoped, tag = 'input window, operand 0']
    #allocation3 [shape = 's32[2]{0}', space=sflag, size = 0x8, scoped, tag = 'scoped memory for tpu_custom_call.1']
    %6 = vsyncpa [#allocation3], 0
    %s7 = scalar_lea.sflag [#allocation3], 1
    %8 = vsyncpa %s7, 0
    loop: start=0, step=1, limit=8
    $region2: #{tpu_custom_call.1} parent=1 // loop_pre_header
      _
    $region3: #{tpu_custom_call.1} parent=1 // loop_header
      %s10 = sphi 0, %s14
      %p11 = scmp.ge.s32.totalorder %s10, 8
      %s17 = sphi 0, %s29
      %s18 = sphi 0, %s25
      %s19 = sphi 0, %s17
      %s20 = sphi 0, %s18
      %s21 = sphi 0, %s19
      %s22 = sphi 0, %s20
      %s36 = sphi 0, %s38
      %s39 = sphi 0, %s36
      %s40 = sphi 0, %s39
      %s56 = sphi 0, %s40
      %s62 = sphi 0, %s64
      %s65 = sphi 0, %s62
      %s66 = sphi 0, %s65
      %s82 = sphi 0, %s66
    $region4: #{tpu_custom_call.1} parent=1 // loop_header_branch
      %13 = sbr.rel (%p11) target = $region8
    $region5: #{tpu_custom_call.1} parent=1 // loop_body
      %s15 = ssub.s32 %s10, 1
      %s16 = ssub.s32 %s10, 2
      %s23 = sadd.s32 1, %s18
      %p24 = scmp.ge.s32.totalorder %s23, 3
      %s25 = scalar_select %p24, 0, %s23
      %s26 = sadd.s32 1, %s17
      %s27 = scalar_select %p24, %s26, %s17
      %p28 = scmp.ge.s32.totalorder %s27, 2
      %s29 = scalar_select %p28, 0, %s27
      %s30 = smul.u32 %s17, 3
      %s31 = sadd.s32 %s30, %s18
      %s32 = smul.u32 %s29, 3
      %s33 = sadd.s32 %s32, %s25
      %s34 = ssub.s32 %s31, %s33
      %p35 = scmp.eq.s32.totalorder %s34, 0
      %s37 = sadd.s32 %s36, 1
      %s38 = scalar_select %p35, %s36, %s37
      %p41 = pneg %p35
      %p42 = scmp.eq.s32.totalorder %s10, 5
      %p43 = por %p41, %p42
      %p44 = scmp.ne.s32.totalorder %s36, %s39
      %p45 = scmp.eq.s32.totalorder %s10, 0
      %p46 = por %p44, %p45
      %p47 = scmp.ne.s32.totalorder %s36, %s39
      %p48 = scmp.eq.s32.totalorder %s15, 5
      %p49 = por %p47, %p48
      %p50 = scmp.ne.s32.totalorder %s39, %s40
      %p51 = scmp.eq.s32.totalorder %s15, 0
      %p52 = por %p50, %p51
      %p53 = scmp.ne.s32.totalorder %s39, %s40
      %p54 = scmp.eq.s32.totalorder %s16, 5
      %p55 = por %p53, %p54
      %p57 = scmp.ne.s32.totalorder %s40, %s56
      %p58 = scmp.eq.s32.totalorder %s16, 0
      %p59 = por %p57, %p58
      %s60 = ssub.s32 %s17, %s29
      %p61 = scmp.eq.s32.totalorder %s60, 0
      %s63 = sadd.s32 %s62, 1
      %s64 = scalar_select %p61, %s62, %s63
      %p67 = pneg %p61
      %p68 = scmp.eq.s32.totalorder %s10, 5
      %p69 = por %p67, %p68
      %p70 = scmp.ne.s32.totalorder %s62, %s65
      %p71 = scmp.eq.s32.totalorder %s10, 0
      %p72 = por %p70, %p71
      %p73 = scmp.ne.s32.totalorder %s62, %s65
      %p74 = scmp.eq.s32.totalorder %s15, 5
      %p75 = por %p73, %p74
      %p76 = scmp.ne.s32.totalorder %s65, %s66
      %p77 = scmp.eq.s32.totalorder %s15, 0
      %p78 = por %p76, %p77
      %p79 = scmp.ne.s32.totalorder %s65, %s66
      %p80 = scmp.eq.s32.totalorder %s16, 5
      %p81 = por %p79, %p80
      %p83 = scmp.ne.s32.totalorder %s66, %s82
      %p84 = scmp.eq.s32.totalorder %s16, 0
      %p85 = por %p83, %p84
      %p86 = scmp.le.s32.totalorder 1, %s10
      %p87 = scmp.lt.s32.totalorder %s10, 7
      %p88 = pnand %p86, %p87
      %p89 = pneg %p88
      // Predicated region
      $region9: #{tpu_custom_call.1} parent=5 // pred_check
        _
      $region10: #{tpu_custom_call.1} parent=5 // pred_check_branch
        %91 = sbr.rel (%p88) target = $region12
      $region11: #{tpu_custom_call.1} parent=5 // pred_region
        %s92 = ssub.s32 %s10, 1
      $region12: #{tpu_custom_call.1} parent=5 // pred_fallthru
        _
      %p93 = scmp.lt.s32.totalorder %s10, 6
      // Predicated region
      $region13: #{tpu_custom_call.1} parent=5 // pred_check
        %p94 = pneg %p93
      $region14: #{tpu_custom_call.1} parent=5 // pred_check_branch
        %96 = sbr.rel (%p94) target = $region16
      $region15: #{tpu_custom_call.1} parent=5 // pred_region
        // Predicated region
        $region17: #{tpu_custom_call.1} parent=15 // pred_check
          %p97 = pneg %p46
        $region18: #{tpu_custom_call.1} parent=15 // pred_check_branch
          %99 = sbr.rel (%p97) target = $region20
        $region19: #{tpu_custom_call.1} parent=15 // pred_region
          %s100 = sand.u32 %s36, 1
          %s101 = scalar_lea.sflag [#allocation3], %s100
          %s102 = sand.u32 %s36, 1
          %s103 = smul.addr %s102, 16
          %s104 = scalar_lea.vmem [#allocation2], %s103
          %s105 = smul.u32 %s17, 3
          %s106 = sadd.s32 %s105, %s18
          %s107 = smul.u32 2, %s106
          %s109 = ssub.s32 256, 256
          %110 = vsyncadd %s101, %s109
          %s111 = smul.addr %s107, 128
          %s112 = scalar_lea.hbm %s0, %s111
          %s113 = sshll.u32 %s104, 4
          %s114 = int_to_ptr.vmem [resolvable:$true] %s113
          %119 = dma.hbm_to_vmem [thread:$0]  %s112, 256, %s114, %s101, 128, 128, 8
        $region20: #{tpu_custom_call.1} parent=15 // pred_fallthru
          _
      $region16: #{tpu_custom_call.1} parent=5 // pred_fallthru
        _
      %p120 = scmp.le.s32.totalorder 1, %s10
      %p121 = scmp.lt.s32.totalorder %s10, 7
      %p122 = pnand %p120, %p121
      %p123 = pneg %p122
      // Predicated region
      $region21: #{tpu_custom_call.1} parent=5 // pred_check
        _
      $region22: #{tpu_custom_call.1} parent=5 // pred_check_branch
        %125 = sbr.rel (%p122) target = $region24
      $region23: #{tpu_custom_call.1} parent=5 // pred_region
        %s126 = ssub.s32 %s10, 1
        %s127 = sand.u32 %s39, 1
        %s128 = scalar_lea.sflag [#allocation3], %s127
        %s129 = sand.u32 %s39, 1
        %s130 = smul.addr %s129, 16
        %s131 = scalar_lea.vmem [#allocation2], %s130
        // Predicated region
        $region25: #{tpu_custom_call.1} parent=23 // pred_check
          %p132 = pneg %p52
        $region26: #{tpu_custom_call.1} parent=23 // pred_check_branch
          %134 = sbr.rel (%p132) target = $region28
        $region27: #{tpu_custom_call.1} parent=23 // pred_region
          %135 = dma.done %s128, 256
        $region28: #{tpu_custom_call.1} parent=23 // pred_fallthru
          _
        %s136 = sand.u32 %s39, 1
        %s137 = scalar_lea.sflag [#allocation3], %s136
        %s138 = sand.u32 %s39, 1
        %s139 = smul.addr %s138, 16
        %s140 = scalar_lea.vmem [#allocation2], %s139
        %p141 = pneg %p52
        %p142 = pneg %p49
        %p143 = pneg %p78
        %p144 = pneg %p75
        %p145 = scmp.lt.s32.totalorder %s19, 1
        %s146 = scalar_select %p145, %s19, 1
        %s147 = smul.addr %s146, 16
        %s148 = smul.addr %s147, 8
        %s149 = scalar_lea.vmem %s1, %s148
        %s150 = smul.u32 %s19, 3
        %s151 = sadd.s32 %s150, %s20
        %s152 = smul.u32 2, %s151
        %p153 = scmp.lt.s32.totalorder %s19, 1
        %s154 = scalar_select %p153, %s19, 1
        %s155 = smul.addr %s154, 16
        %s156 = smul.addr %s155, 8
        %s157 = scalar_lea.vmem %s1, %s156
        %p158 = scmp.eq.s32.totalorder %s20, 0
        // Predicated region
        $region29: #{tpu_custom_call.1} parent=23 // pred_check
          %p159 = pneg %p158
        $region30: #{tpu_custom_call.1} parent=23 // pred_check_branch
          %161 = sbr.rel (%p159) target = $region32
        $region31: #{tpu_custom_call.1} parent=23 // pred_region
          %vm162 = vcmask 1031168
          %163 = vst.msk [vmem:[%s157] sm:$0xff] %vm162, 0.0
          %164 = vst.msk [vmem:[%s157 + $0x8] sm:$0xff] %vm162, 0.0
          %165 = vst.msk [vmem:[%s157 + $0x10] sm:$0xff] %vm162, 0.0
          %166 = vst.msk [vmem:[%s157 + $0x18] sm:$0xff] %vm162, 0.0
          %167 = vst.msk [vmem:[%s157 + $0x20] sm:$0xff] %vm162, 0.0
          %168 = vst.msk [vmem:[%s157 + $0x28] sm:$0xff] %vm162, 0.0
          %169 = vst.msk [vmem:[%s157 + $0x30] sm:$0xff] %vm162, 0.0
          %170 = vst.msk [vmem:[%s157 + $0x38] sm:$0xff] %vm162, 0.0
          %171 = vst.msk [vmem:[%s157 + $0x40] sm:$0xff] %vm162, 0.0
          %172 = vst.msk [vmem:[%s157 + $0x48] sm:$0xff] %vm162, 0.0
          %173 = vst.msk [vmem:[%s157 + $0x50] sm:$0xff] %vm162, 0.0
          %174 = vst.msk [vmem:[%s157 + $0x58] sm:$0xff] %vm162, 0.0
          %175 = vst.msk [vmem:[%s157 + $0x60] sm:$0xff] %vm162, 0.0
          %176 = vst.msk [vmem:[%s157 + $0x68] sm:$0xff] %vm162, 0.0
          %177 = vst.msk [vmem:[%s157 + $0x70] sm:$0xff] %vm162, 0.0
          %vm178 = vcmask 1029120
          %179 = vst.msk [vmem:[%s157 + $0x78] sm:$0x3f] %vm178, 0.0
        $region32: #{tpu_custom_call.1} parent=23 // pred_fallthru
          _
        %v180 = vld [vmem:[%s131] sm:$0xff]
        %v181 = vld [vmem:[%s131 + $0x8] sm:$0xff]
        %v182 = vld [vmem:[%s157] sm:$0xff]
        %v183 = vld [vmem:[%s157 + $0x8] sm:$0xff]
        %v184 = vld [vmem:[%s157 + $0x10] sm:$0xff]
        %v185 = vld [vmem:[%s157 + $0x18] sm:$0xff]
        %v186 = vld [vmem:[%s157 + $0x20] sm:$0xff]
        %v187 = vld [vmem:[%s157 + $0x28] sm:$0xff]
        %v188 = vld [vmem:[%s157 + $0x30] sm:$0xff]
        %v189 = vld [vmem:[%s157 + $0x38] sm:$0xff]
        %v190 = vld [vmem:[%s157 + $0x40] sm:$0xff]
        %v191 = vld [vmem:[%s157 + $0x48] sm:$0xff]
        %v192 = vld [vmem:[%s157 + $0x50] sm:$0xff]
        %v193 = vld [vmem:[%s157 + $0x58] sm:$0xff]
        %v194 = vld [vmem:[%s157 + $0x60] sm:$0xff]
        %v195 = vld [vmem:[%s157 + $0x68] sm:$0xff]
        %v196 = vld [vmem:[%s157 + $0x70] sm:$0xff]
        %v197 = vld [vmem:[%s157 + $0x78] sm:$0x3f]
        %198 = vxpose.xlu0.b32.start [1/16] %v180, 128
        %199 = vxpose.xlu0.b32.cont [2/16] %v181, 128
        %200 = vxpose.xlu0.b32.cont [3/16] 0.0, 128
        %201 = vxpose.xlu0.b32.cont [4/16] 0.0, 128
        %202 = vxpose.xlu0.b32.cont [5/16] 0.0, 128
        %203 = vxpose.xlu0.b32.cont [6/16] 0.0, 128
        %204 = vxpose.xlu0.b32.cont [7/16] 0.0, 128
        %205 = vxpose.xlu0.b32.cont [8/16] 0.0, 128
        %206 = vxpose.xlu0.b32.cont [9/16] 0.0, 128
        %207 = vxpose.xlu0.b32.cont [10/16] 0.0, 128
        %208 = vxpose.xlu0.b32.cont [11/16] 0.0, 128
        %209 = vxpose.xlu0.b32.cont [12/16] 0.0, 128
        %210 = vxpose.xlu0.b32.cont [13/16] 0.0, 128
        %211 = vxpose.xlu0.b32.cont [14/16] 0.0, 128
        %212 = vxpose.xlu0.b32.cont [15/16] 0.0, 128
        %213 = vxpose.xlu0.b32.end [16/16] 0.0, 128
        %v214 = vpop.trf.xlu0
        %v215 = vpop.trf.xlu0
        %v216 = vpop.trf.xlu0
        %v217 = vpop.trf.xlu0
        %v218 = vpop.trf.xlu0
        %v219 = vpop.trf.xlu0
        %v220 = vpop.trf.xlu0
        %v221 = vpop.trf.xlu0
        %v222 = vpop.trf.xlu0
        %v223 = vpop.trf.xlu0
        %v224 = vpop.trf.xlu0
        %v225 = vpop.trf.xlu0
        %v226 = vpop.trf.xlu0
        %v227 = vpop.trf.xlu0
        %v228 = vpop.trf.xlu0
        %v229 = vpop.trf.xlu0
        %vm230 = vcmask 130048
        %v232 = vsel %vm230, %v214, 0
        %v235 = vsel %vm230, %v215, 0
        %v238 = vsel %vm230, %v216, 0
        %v241 = vsel %vm230, %v217, 0
        %v244 = vsel %vm230, %v218, 0
        %v247 = vsel %vm230, %v219, 0
        %v250 = vsel %vm230, %v220, 0
        %v253 = vsel %vm230, %v221, 0
        %v256 = vsel %vm230, %v222, 0
        %v259 = vsel %vm230, %v223, 0
        %v262 = vsel %vm230, %v224, 0
        %v265 = vsel %vm230, %v225, 0
        %v268 = vsel %vm230, %v226, 0
        %v271 = vsel %vm230, %v227, 0
        %v274 = vsel %vm230, %v228, 0
        %v277 = vsel %vm230, %v229, 0
        %279 = vmatprep.subr.mxu0 0.0
        %280 = vmatpush1.msra.mxu0 0.0
        %281 = vmatprep.subr.mxu0 0.0
        %282 = vmatpush1.msra.mxu0 0.0
        %283 = vmatprep.subr.mxu0 0.0
        %284 = vmatpush1.msra.mxu0 0.0
        %285 = vmatprep.subr.mxu0 0.0
        %286 = vmatpush1.msra.mxu0 0.0
        %287 = vmatprep.subr.mxu0 0.0
        %288 = vmatpush1.msra.mxu0 0.0
        %289 = vmatprep.subr.mxu0 0.0
        %290 = vmatpush1.msra.mxu0 0.0
        %291 = vmatprep.subr.mxu0 0.0
        %292 = vmatpush1.msra.mxu0 0.0
        %293 = vmatprep.subr.mxu0 0.0
        %294 = vmatpush1.msra.mxu0 0.0
        %295 = vmatprep.subr.mxu0 0.0
        %296 = vmatpush1.msra.mxu0 0.0
        %297 = vmatprep.subr.mxu0 0.0
        %298 = vmatpush1.msra.mxu0 0.0
        %299 = vmatprep.subr.mxu0 0.0
        %300 = vmatpush1.msra.mxu0 0.0
        %301 = vmatprep.subr.mxu0 0.0
        %302 = vmatpush1.msra.mxu0 0.0
        %303 = vmatprep.subr.mxu0 0.0
        %304 = vmatpush1.msra.mxu0 0.0
        %305 = vmatprep.subr.mxu0 0.0
        %306 = vmatpush1.msra.mxu0 0.0
        %307 = vmatprep.subr.mxu0 0.0
        %308 = vmatpush1.msra.mxu0 %v181
        %309 = vmatprep.subr.mxu0 0.0
        %310 = vmatpush1.msra.mxu0 %v180
        %311 = vmatprep.subr.mxu0 0.0
        %312 = vmatpush2.msra.mxu0 0.0
        %313 = vmatprep.subr.mxu0 0.0
        %314 = vmatpush2.msra.mxu0 0.0
        %315 = vmatprep.subr.mxu0 0.0
        %316 = vmatpush2.msra.mxu0 0.0
        %317 = vmatprep.subr.mxu0 0.0
        %318 = vmatpush2.msra.mxu0 0.0
        %319 = vmatprep.subr.mxu0 0.0
        %320 = vmatpush2.msra.mxu0 0.0
        %321 = vmatprep.subr.mxu0 0.0
        %322 = vmatpush2.msra.mxu0 0.0
        %323 = vmatprep.subr.mxu0 0.0
        %324 = vmatpush2.msra.mxu0 0.0
        %325 = vmatprep.subr.mxu0 0.0
        %326 = vmatpush2.msra.mxu0 0.0
        %327 = vmatprep.subr.mxu0 0.0
        %328 = vmatpush2.msra.mxu0 0.0
        %329 = vmatprep.subr.mxu0 0.0
        %330 = vmatpush2.msra.mxu0 0.0
        %331 = vmatprep.subr.mxu0 0.0
        %332 = vmatpush2.msra.mxu0 0.0
        %333 = vmatprep.subr.mxu0 0.0
        %334 = vmatpush2.msra.mxu0 0.0
        %335 = vmatprep.subr.mxu0 0.0
        %336 = vmatpush2.msra.mxu0 0.0
        %337 = vmatprep.subr.mxu0 0.0
        %338 = vmatpush2.msra.mxu0 0.0
        %339 = vmatprep.subr.mxu0 0.0
        %340 = vmatpush2.msra.mxu0 0.0
        %341 = vmatprep.subr.mxu0 0.0
        %342 = vmatpush2.msra.mxu0 0.0
        %343 = vmatprep.mubr.f32.mxu0 0.0
        %344 = vmatmul.mubr.f32.gmra.mxu0 %v232
        %v345 = vpop.f32.mrf.mxu0
        %v346 = vadd.f32 0.0, %v345
        %v347 = vpop.f32.mrf.mxu0
        %348 = vmatprep.mubr.f32.mxu0 0.0
        %349 = vmatmul.mubr.f32.gmra.mxu0 %v235
        %v350 = vpop.f32.mrf.mxu0
        %v351 = vadd.f32 0.0, %v350
        %v352 = vpop.f32.mrf.mxu0
        %353 = vmatprep.mubr.f32.mxu0 0.0
        %354 = vmatmul.mubr.f32.gmra.mxu0 %v238
        %v355 = vpop.f32.mrf.mxu0
        %v356 = vadd.f32 0.0, %v355
        %v357 = vpop.f32.mrf.mxu0
        %358 = vmatprep.mubr.f32.mxu0 0.0
        %359 = vmatmul.mubr.f32.gmra.mxu0 %v241
        %v360 = vpop.f32.mrf.mxu0
        %v361 = vadd.f32 0.0, %v360
        %v362 = vpop.f32.mrf.mxu0
        %363 = vmatprep.mubr.f32.mxu0 0.0
        %364 = vmatmul.mubr.f32.gmra.mxu0 %v244
        %v365 = vpop.f32.mrf.mxu0
        %v366 = vadd.f32 0.0, %v365
        %v367 = vpop.f32.mrf.mxu0
        %368 = vmatprep.mubr.f32.mxu0 0.0
        %369 = vmatmul.mubr.f32.gmra.mxu0 %v247
        %v370 = vpop.f32.mrf.mxu0
        %v371 = vadd.f32 0.0, %v370
        %v372 = vpop.f32.mrf.mxu0
        %373 = vmatprep.mubr.f32.mxu0 0.0
        %374 = vmatmul.mubr.f32.gmra.mxu0 %v250
        %v375 = vpop.f32.mrf.mxu0
        %v376 = vadd.f32 0.0, %v375
        %v377 = vpop.f32.mrf.mxu0
        %378 = vmatprep.mubr.f32.mxu0 0.0
        %379 = vmatmul.mubr.f32.gmra.mxu0 %v253
        %v380 = vpop.f32.mrf.mxu0
        %v381 = vadd.f32 0.0, %v380
        %v382 = vpop.f32.mrf.mxu0
        %383 = vmatprep.mubr.f32.mxu0 0.0
        %384 = vmatmul.mubr.f32.gmra.mxu0 %v256
        %v385 = vpop.f32.mrf.mxu0
        %v386 = vadd.f32 0.0, %v385
        %v387 = vpop.f32.mrf.mxu0
        %388 = vmatprep.mubr.f32.mxu0 0.0
        %389 = vmatmul.mubr.f32.gmra.mxu0 %v259
        %v390 = vpop.f32.mrf.mxu0
        %v391 = vadd.f32 0.0, %v390
        %v392 = vpop.f32.mrf.mxu0
        %393 = vmatprep.mubr.f32.mxu0 0.0
        %394 = vmatmul.mubr.f32.gmra.mxu0 %v262
        %v395 = vpop.f32.mrf.mxu0
        %v396 = vadd.f32 0.0, %v395
        %v397 = vpop.f32.mrf.mxu0
        %398 = vmatprep.mubr.f32.mxu0 0.0
        %399 = vmatmul.mubr.f32.gmra.mxu0 %v265
        %v400 = vpop.f32.mrf.mxu0
        %v401 = vadd.f32 0.0, %v400
        %v402 = vpop.f32.mrf.mxu0
        %403 = vmatprep.mubr.f32.mxu0 0.0
        %404 = vmatmul.mubr.f32.gmra.mxu0 %v268
        %v405 = vpop.f32.mrf.mxu0
        %v406 = vadd.f32 0.0, %v405
        %v407 = vpop.f32.mrf.mxu0
        %408 = vmatprep.mubr.f32.mxu0 0.0
        %409 = vmatmul.mubr.f32.gmra.mxu0 %v271
        %v410 = vpop.f32.mrf.mxu0
        %v411 = vadd.f32 0.0, %v410
        %v412 = vpop.f32.mrf.mxu0
        %413 = vmatprep.mubr.f32.mxu0 0.0
        %414 = vmatmul.mubr.f32.gmra.mxu0 %v274
        %v415 = vpop.f32.mrf.mxu0
        %v416 = vadd.f32 0.0, %v415
        %v417 = vpop.f32.mrf.mxu0
        %418 = vmatprep.mubr.f32.mxu0 0.0
        %419 = vmatmul.mubr.f32.gmra.mxu0 %v277
        %v420 = vpop.f32.mrf.mxu0
        %v421 = vadd.f32 0.0, %v420
        %v422 = vpop.f32.mrf.mxu0
        %423 = vdwg.mxu0
        %v424 = vadd.f32 %v182, %v346
        %v425 = vadd.f32 %v183, %v351
        %v426 = vadd.f32 %v184, %v356
        %v427 = vadd.f32 %v185, %v361
        %v428 = vadd.f32 %v186, %v366
        %v429 = vadd.f32 %v187, %v371
        %v430 = vadd.f32 %v188, %v376
        %v431 = vadd.f32 %v189, %v381
        %v432 = vadd.f32 %v190, %v386
        %v433 = vadd.f32 %v191, %v391
        %v434 = vadd.f32 %v192, %v396
        %v435 = vadd.f32 %v193, %v401
        %v436 = vadd.f32 %v194, %v406
        %v437 = vadd.f32 %v195, %v411
        %v438 = vadd.f32 %v196, %v416
        %v439 = vadd.f32 %v197, %v421
        %vm440 = vcmask 1031168
        %441 = vst.msk [vmem:[%s157] sm:$0xff] %vm440, %v424
        %442 = vst.msk [vmem:[%s157 + $0x8] sm:$0xff] %vm440, %v425
        %443 = vst.msk [vmem:[%s157 + $0x10] sm:$0xff] %vm440, %v426
        %444 = vst.msk [vmem:[%s157 + $0x18] sm:$0xff] %vm440, %v427
        %445 = vst.msk [vmem:[%s157 + $0x20] sm:$0xff] %vm440, %v428
        %446 = vst.msk [vmem:[%s157 + $0x28] sm:$0xff] %vm440, %v429
        %447 = vst.msk [vmem:[%s157 + $0x30] sm:$0xff] %vm440, %v430
        %448 = vst.msk [vmem:[%s157 + $0x38] sm:$0xff] %vm440, %v431
        %449 = vst.msk [vmem:[%s157 + $0x40] sm:$0xff] %vm440, %v432
        %450 = vst.msk [vmem:[%s157 + $0x48] sm:$0xff] %vm440, %v433
        %451 = vst.msk [vmem:[%s157 + $0x50] sm:$0xff] %vm440, %v434
        %452 = vst.msk [vmem:[%s157 + $0x58] sm:$0xff] %vm440, %v435
        %453 = vst.msk [vmem:[%s157 + $0x60] sm:$0xff] %vm440, %v436
        %454 = vst.msk [vmem:[%s157 + $0x68] sm:$0xff] %vm440, %v437
        %455 = vst.msk [vmem:[%s157 + $0x70] sm:$0xff] %vm440, %v438
        %vm456 = vcmask 1029120
        %457 = vst.msk [vmem:[%s157 + $0x78] sm:$0x3f] %vm456, %v439
        %p458 = scmp.lt.s32.totalorder %s19, 1
        %s459 = scalar_select %p458, %s19, 1
        %s460 = smul.addr %s459, 16
        %s461 = smul.addr %s460, 8
        %s462 = scalar_lea.vmem %s1, %s461
        // Predicated region
        $region33: #{tpu_custom_call.1} parent=23 // pred_check
          %p463 = pneg %p75
        $region34: #{tpu_custom_call.1} parent=23 // pred_check_branch
          %465 = sbr.rel (%p463) target = $region36
        $region35: #{tpu_custom_call.1} parent=23 // pred_region
          _
        $region36: #{tpu_custom_call.1} parent=23 // pred_fallthru
          _
      $region24: #{tpu_custom_call.1} parent=5 // pred_fallthru
        _
      %p466 = scmp.le.s32.totalorder 2, %s10
      // Predicated region
      $region37: #{tpu_custom_call.1} parent=5 // pred_check
        %p467 = pneg %p466
      $region38: #{tpu_custom_call.1} parent=5 // pred_check_branch
        %469 = sbr.rel (%p467) target = $region40
      $region39: #{tpu_custom_call.1} parent=5 // pred_region
        %s470 = ssub.s32 %s10, 2
        // Predicated region
        $region41: #{tpu_custom_call.1} parent=39 // pred_check
          %p471 = pneg %p81
        $region42: #{tpu_custom_call.1} parent=39 // pred_check_branch
          %473 = sbr.rel (%p471) target = $region44
        $region43: #{tpu_custom_call.1} parent=39 // pred_region
          %p474 = scmp.lt.s32.totalorder %s21, 1
          %s475 = scalar_select %p474, %s21, 1
          %s476 = smul.addr %s475, 16
          %s477 = smul.addr %s476, 8
          %s478 = scalar_lea.vmem %s1, %s477
        $region44: #{tpu_custom_call.1} parent=39 // pred_fallthru
          _
      $region40: #{tpu_custom_call.1} parent=5 // pred_fallthru
        _
    $region6: #{tpu_custom_call.1} parent=1 // loop_footer
      %s14 = sadd.s32 1, %s10
    $region7: #{tpu_custom_call.1} parent=1 // loop_footer_branch
      %9 = sbr.rel target = $region3
    $region8: #{tpu_custom_call.1} parent=1 // loop_exit
      _
    %479 = vsyncpa [#allocation3], 1
    %s480 = scalar_lea.sflag [#allocation3], 1
    %481 = vsyncpa %s480, 1

</llo_original>
